<compile_context>
chip_gen: v7x
topology: tpu7x:2x2x1
jax: 0.10.0
libtpu: 0.0.40
codegen_flags: <defaults>
</compile_context>

<pallas_src>
import math

import jax
import jax.numpy as jnp
from jax.experimental import pallas as pl
from jax.experimental.pallas import tpu as pltpu


# ----------------------------------------------------------------------------
# Static tree -> static schedule (trace-time flattening)
# ----------------------------------------------------------------------------

class TreeNode:
    def __init__(self, *, is_preterminal, rule, node, children=()):
        self.is_preterminal = is_preterminal
        self.rule = rule
        self.node = node
        self.children = list(children)


def build_schedule(tree):
    """Flatten the static tree.

    Returns (root_is_leaf, gru_groups, leaf_rules, used_rules, used_nts) where
      gru_groups: tuple of (w_idx, parents, child_specs), level-ordered; all
        same-rule parents of a level are grouped so they share one matmul.
        child_specs[g][pos] = (kind, id, nt_idx)  kind in {"slot", "leaf"}.
      leaf_rules: terminal rule per leaf, in DFS (reference output) order.
      used_rules / used_nts: pruned index lists for host-side weight gathering.
    """
    leaf_ids = {}
    leaf_rules = []

    def dfs(node):
        if node.is_preterminal:
            leaf_ids[id(node)] = len(leaf_rules)
            leaf_rules.append(node.rule)
        else:
            assert 1 <= len(node.children) <= 2, "GRUDecode assumed binary"
            for c in node.children:
                dfs(c)

    dfs(tree)

    root_is_leaf = tree.is_preterminal
    gru_groups = []
    used_rules, rule_to_widx = [], {}
    used_nts, nt_to_idx = [], {}

    if not root_is_leaf:
        slot_of = {id(tree): 0}
        next_slot = [1]
        level = [tree]
        while level:
            by_rule = {}
            for nd in level:
                by_rule.setdefault(nd.rule, []).append(nd)
            next_level = []
            for rule in sorted(by_rule):
                if rule not in rule_to_widx:
                    rule_to_widx[rule] = len(used_rules)
                    used_rules.append(rule)
                parents, child_specs = [], []
                for nd in by_rule[rule]:
                    parents.append(slot_of[id(nd)])
                    specs = []
                    for c in nd.children:
                        if c.node not in nt_to_idx:
                            nt_to_idx[c.node] = len(used_nts)
                            used_nts.append(c.node)
                        nt_idx = nt_to_idx[c.node]
                        if c.is_preterminal:
                            specs.append(("leaf", leaf_ids[id(c)], nt_idx))
                        else:
                            s = next_slot[0]
                            next_slot[0] += 1
                            slot_of[id(c)] = s
                            specs.append(("slot", s, nt_idx))
                            next_level.append(c)
                    child_specs.append(tuple(specs))
                gru_groups.append(
                    (rule_to_widx[rule], tuple(parents), tuple(child_specs)))
            level = next_level

    return (root_is_leaf, tuple(gru_groups), tuple(leaf_rules),
            tuple(used_rules), tuple(used_nts))


# ----------------------------------------------------------------------------
# Fused whole-tree kernel (single pallas_call per forward)
# ----------------------------------------------------------------------------

def _make_tree_kernel(schedule, B, H, O, O_pad, training, use_nt):
    root_is_leaf, gru_groups, leaf_rules, _used_rules, _used_nts = schedule
    has_gru = bool(gru_groups)

    def kernel(*refs):
        it = iter(refs)
        enc_ref = next(it)
        gw_ref = gb_ref = nt_ref = None
        if has_gru:
            gw_ref = next(it)          # (Ru, H, 8H) bf16 fused GRU weights
            gb_ref = next(it)          # (Ru, 1, 8H) f32 fused GRU biases
            if use_nt:
                nt_ref = next(it)      # (Nu, 1, H) f32 nonterminal biases
        wt_ref = next(it)              # (L, H, O_pad) bf16 per-leaf terminal W
        out_ref = next(it)             # (L, B, O_pad) f32 output
        leaf_ref = next(it)            # (L, B, H) f32 VMEM scratch (leaf hiddens)

        enc = enc_ref[...].astype(jnp.float32)

        if root_is_leaf:
            leaf_ref[0] = enc
        else:
            hid = {0: enc}
            nt_cache = {}

            def nt_bias(i):
                # Hoisted: a single VMEM read per used nonterminal id.
                if i not in nt_cache:
                    nt_cache[i] = nt_ref[i]
                return nt_cache[i]

            for w_idx, parents, child_specs in gru_groups:
                if len(parents) == 1:
                    h_stack = hid[parents[0]]
                else:
                    h_stack = jnp.concatenate([hid[p] for p in parents], axis=0)
                # ONE fused matmul for all same-rule parents and BOTH child
                # positions: (G*B, H) @ (H, 8H), bf16 operands, f32 accumulate.
                g = jnp.dot(h_stack.astype(jnp.bfloat16), gw_ref[w_idx],
                            preferred_element_type=jnp.float32)
                g = g + gb_ref[w_idx]                          # (G*B, 8H) f32
                for pos in range(2):
                    if not any(len(cs) > pos for cs in child_specs):
                        continue
                    off = pos * 4 * H
                    # TODO(synk): if H is not a multiple of 128 these gate
                    # slices cut lanes inside a vreg; pad H for production.
                    r = jax.nn.sigmoid(g[:, off:off + H])
                    z = jax.nn.sigmoid(g[:, off + H:off + 2 * H])
                    # n = tanh(W_n h + b_in + r * (U_n h + b_hn))  (GRUCell form)
                    n = jnp.tanh(g[:, off + 2 * H:off + 3 * H]
                                 + r * g[:, off + 3 * H:off + 4 * H])
                    hc_stack = (1.0 - z) * n + z * h_stack     # (G*B, H)
                    for gi, specs in enumerate(child_specs):
                        if pos >= len(specs):
                            continue
                        kind, cid, nt_idx = specs[pos]
                        hc = hc_stack[gi * B:(gi + 1) * B]
                        if use_nt:
                            hc = hc + nt_bias(nt_idx)
                        if kind == "leaf":
                            # Spill the finished leaf hidden to the VMEM slab
                            # immediately -> bounds vreg live ranges.
                            leaf_ref[cid] = hc
                        else:
                            hid[cid] = hc
                for p in parents:          # parent hiddens are dead now
                    del hid[p]

        # Batched terminal projections + fused softmax: one einsum, one
        # max/exp/sum pass, one lane-dense store of the whole block.
        lh = leaf_ref[...].astype(jnp.bfloat16)                # (L, B, H)
        logits = jnp.einsum("lbh,lho->lbo", lh, wt_ref[...],
                            preferred_element_type=jnp.float32)  # (L, B, O_pad)
        if training:
            out_ref[...] = logits
        else:
            if O_pad > O:
                lane = jax.lax.broadcasted_iota(jnp.int32, logits.shape, 2)
                logits = jnp.where(lane < O, logits, -1e30)
            m = jnp.max(logits, axis=-1, keepdims=True)
            e = jnp.exp(logits - m)
            # Exact division for numerical parity with torch.softmax.
            out_ref[...] = e / jnp.sum(e, axis=-1, keepdims=True)

    return kernel


# ----------------------------------------------------------------------------
# Model
# ----------------------------------------------------------------------------

class DecoderSyntaxTreeGRUPallas:
    def __init__(self, output_size, hidden_size, num_nonterminal_rules,
                 num_terminal_rules, num_nonterminals, key):
        self.H = H = hidden_size
        self.O = output_size
        self.O_pad = ((output_size + 127) // 128) * 128
        k = 1.0 / math.sqrt(H)
        k_gru, k_term = jax.random.split(key)

        # Per-rule GRU params (PyTorch GRUCell convention), both child
        # positions fused into one (H, 8H) weight:
        #   columns = [ L: W_rz+U_rz | W_n | U_n  |  R: W_rz+U_rz | W_n | U_n ]
        # (W and U collapse for the r/z gates because x == h; the n gate keeps
        #  them separate so n = tanh(W_n h + b_in + r*(U_n h + b_hn)) matches
        #  GRUCell exactly.)
        R = num_nonterminal_rules
        gk = jax.random.split(k_gru, R * 2 * 4)
        w_rows, b_rows = [], []
        for r_ in range(R):
            w_cols, b_cols = [], []
            for pos in range(2):
                base = (r_ * 2 + pos) * 4
                w = jax.random.uniform(gk[base + 0], (H, 3 * H), jnp.float32, -k, k)
                u = jax.random.uniform(gk[base + 1], (H, 3 * H), jnp.float32, -k, k)
                bih = jax.random.uniform(gk[base + 2], (1, 3 * H), jnp.float32, -k, k)
                bhh = jax.random.uniform(gk[base + 3], (1, 3 * H), jnp.float32, -k, k)
                w_cols.append(jnp.concatenate(
                    [w[:, :2 * H] + u[:, :2 * H], w[:, 2 * H:], u[:, 2 * H:]], axis=1))
                b_cols.append(jnp.concatenate(
                    [bih[:, :2 * H] + bhh[:, :2 * H], bih[:, 2 * H:], bhh[:, 2 * H:]],
                    axis=1))
            w_rows.append(jnp.concatenate(w_cols, axis=1))     # (H, 8H)
            b_rows.append(jnp.concatenate(b_cols, axis=1))     # (1, 8H)
        self.gru_wu = jnp.stack(w_rows)                        # (R, H, 8H) f32
        self.gru_b = jnp.stack(b_rows)                         # (R, 1, 8H) f32
        self.gru_wu_bf16 = self.gru_wu.astype(jnp.bfloat16)

        # Terminal rule weights: kaiming_uniform_(a=sqrt(5)) on (O, H)
        # => uniform(-1/sqrt(H), 1/sqrt(H)).  Stored pre-transposed (H, O) and
        # zero-padded along O to a multiple of 128 for lane-dense stores.
        tk = jax.random.split(k_term, num_terminal_rules)
        tw = jnp.stack([jax.random.uniform(tk[i], (H, output_size),
                                           jnp.float32, -k, k)
                        for i in range(num_terminal_rules)])   # (T, H, O)
        self.terminal_w = jnp.pad(
            tw, ((0, 0), (0, 0), (0, self.O_pad - output_size)))  # (T, H, O_pad)
        self.terminal_w_bf16 = self.terminal_w.astype(jnp.bfloat16)

        # Nonterminal child biases (zeros in the reference init).
        self.nt_biases = jnp.zeros((num_nonterminals, 1, H), jnp.float32)
        # Known-zero biases are folded out of the kernel entirely.
        self.nt_bias_is_zero = bool(jnp.all(self.nt_biases == 0.0))

        self._kernel_cache = {}
        self._operand_cache = {}

    # -- kernel construction --------------------------------------------------
    def _get_kernel(self, schedule, batch, training, use_nt):
        key = (schedule, batch, training, use_nt)
        fn = self._kernel_cache.get(key)
        if fn is not None:
            return fn

        _root_is_leaf, gru_groups, leaf_rules, used_rules, used_nts = schedule
        H, O, O_pad = self.H, self.O, self.O_pad
        B, L = batch, len(leaf_rules)
        has_gru = bool(gru_groups)

        kernel = _make_tree_kernel(schedule, B, H, O, O_pad, training, use_nt)

        vmem = pl.BlockSpec(memory_space=pltpu.MemorySpace.VMEM)
        n_inputs = 1 + (2 + int(use_nt) if has_gru else 0) + 1
        in_specs = [vmem] * n_inputs

        # Explicit scoped-VMEM limit sized from the pruned resident operands.
        in_bytes = B * H * 4 + L * H * O_pad * 2
        if has_gru:
            in_bytes += len(used_rules) * (H * 8 * H * 2 + 8 * H * 4)
            if use_nt:
                in_bytes += len(used_nts) * H * 4
        out_bytes = L * B * O_pad * 4
        scratch_bytes = L * B * H * 4
        vmem_limit = min(
            max(2 * (in_bytes + out_bytes + scratch_bytes) + (4 << 20), 16 << 20),
            64 << 20)

        # TODO(synk): on v7x a leading batch-tile grid axis with
        # dimension_semantics=("parallel",) would use the second TensorCore;
        # not worthwhile at these small batch sizes.
        fn = pl.pallas_call(
            kernel,
            out_shape=jax.ShapeDtypeStruct((L, B, O_pad), jnp.float32),
            in_specs=in_specs,
            out_specs=vmem,
            scratch_shapes=[pltpu.VMEM((L, B, H), jnp.float32)],
            compiler_params=pltpu.CompilerParams(vmem_limit_bytes=vmem_limit),
        )
        self._kernel_cache[key] = fn
        return fn

    # -- forward --------------------------------------------------------------
    def forward(self, tree, encoding, training=False):
        schedule = build_schedule(tree)
        _root_is_leaf, gru_groups, leaf_rules, used_rules, used_nts = schedule
        B = encoding.shape[0]
        use_nt = (not self.nt_bias_is_zero) and bool(gru_groups)

        # Prune + cast weights to exactly what this (static) tree references.
        ops = self._operand_cache.get(schedule)
        if ops is None:
            ops = []
            if gru_groups:
                ridx = jnp.asarray(used_rules, jnp.int32)
                ops.append(self.gru_wu_bf16[ridx])             # (Ru, H, 8H) bf16
                ops.append(self.gru_b[ridx])                   # (Ru, 1, 8H) f32
                if use_nt:
                    ops.append(self.nt_biases[jnp.asarray(used_nts, jnp.int32)])
            ops.append(self.terminal_w_bf16[jnp.asarray(leaf_rules, jnp.int32)])
            ops = tuple(ops)
            self._operand_cache[schedule] = ops

        fn = self._get_kernel(schedule, B, training, use_nt)
        out = fn(encoding, *ops)                               # (L, B, O_pad)
        return out[:, :, :self.O]


# ----------------------------------------------------------------------------
# Pure-JAX reference (f32) mirroring the PyTorch recursive_forward
# ----------------------------------------------------------------------------

def reference_forward(model, tree, encoding, training=False):
    H, O = model.H, model.O

    def gru_children(rule, h):
        g = h @ model.gru_wu[rule] + model.gru_b[rule]
        outs = []
        for pos in range(2):
            off = pos * 4 * H
            r = jax.nn.sigmoid(g[:, off:off + H])
            z = jax.nn.sigmoid(g[:, off + H:off + 2 * H])
            n = jnp.tanh(g[:, off + 2 * H:off + 3 * H]
                         + r * g[:, off + 3 * H:off + 4 * H])
            outs.append((1.0 - z) * n + z * h)
        return outs

    def rec(node, h):
        if node.is_preterminal:
            return [h @ model.terminal_w[node.rule][:, :O]]
        hcs = gru_children(node.rule, h)
        out = []
        for c, hc in zip(node.children, hcs):
            out += rec(c, hc + model.nt_biases[c.node])
        return out

    preds = jnp.stack(rec(tree, encoding))
    if not training:
        preds = jax.nn.softmax(preds, axis=2)
    return preds


# ----------------------------------------------------------------------------
# Main
# ----------------------------------------------------------------------------

if __name__ == "__main__":
    output_size = 64
    hidden_size = 32
    batch = 2
    num_nonterminal_rules = 3
    num_terminal_rules = 4
    num_nonterminals = 5

    key = jax.random.PRNGKey(0)
    k_model, k_enc = jax.random.split(key)

    model = DecoderSyntaxTreeGRUPallas(
        output_size, hidden_size, num_nonterminal_rules,
        num_terminal_rules, num_nonterminals, k_model)

    # Small deterministic tree.  The two rule-1 nodes at the same depth
    # exercise the same-rule parent-grouping (stacked matmul) path.
    leaf_a1 = TreeNode(is_preterminal=True, rule=0, node=3)
    leaf_a2 = TreeNode(is_preterminal=True, rule=2, node=4)
    nt_a = TreeNode(is_preterminal=False, rule=1, node=1, children=[leaf_a1, leaf_a2])
    leaf_b1 = TreeNode(is_preterminal=True, rule=3, node=2)
    leaf_b2 = TreeNode(is_preterminal=True, rule=1, node=4)
    nt_b = TreeNode(is_preterminal=False, rule=1, node=2, children=[leaf_b1, leaf_b2])
    root = TreeNode(is_preterminal=False, rule=0, node=0, children=[nt_a, nt_b])

    encoding = jax.random.normal(k_enc, (batch, hidden_size), jnp.float32)

    preds = model.forward(root, encoding, training=False)     # (4, 2, 64)
    preds = jax.block_until_ready(preds)

    assert preds.shape == (4, batch, output_size), preds.shape
    assert bool(jnp.all(jnp.isfinite(preds)))
    # exact-division softmax -> tight row-sum tolerance
    assert bool(jnp.allclose(jnp.sum(preds, axis=2), 1.0, atol=1e-4))

    # Numerical check against the pure-JAX f32 reference (kernel uses bf16
    # matmul operands, hence the loose tolerance).
    ref = reference_forward(model, root, encoding, training=False)
    assert bool(jnp.allclose(preds, ref, atol=2e-2, rtol=0.0))

    print("KERNEL_OK")
</pallas_src>

<mosaic_0001>
module attributes {stable_mosaic.version = 11 : i64} {
  func.func @kernel(%arg0: memref<2x32xf32, #tpu.memory_space<vmem>>, %arg1: memref<2x32x256xbf16, #tpu.memory_space<vmem>>, %arg2: memref<2x1x256xf32, #tpu.memory_space<vmem>>, %arg3: memref<4x32x128xbf16, #tpu.memory_space<vmem>>, %arg4: memref<4x2x128xf32, #tpu.memory_space<vmem>>, %arg5: memref<4x2x32xf32, #tpu.memory_space<vmem>>) attributes {dimension_semantics = [], scalar_prefetch = 0 : i64, scratch_operands = 1 : i64, tpu.core_type = #tpu.core_type<tc>} {
    %c0 = arith.constant 0 : index
    %c0_0 = arith.constant 0 : index
    %0 = vector.load %arg0[%c0, %c0_0] : memref<2x32xf32, #tpu.memory_space<vmem>>, vector<2x32xf32>
    %1 = arith.truncf %0 : vector<2x32xf32> to vector<2x32xbf16>
    %c0_1 = arith.constant 0 : index
    %c0_2 = arith.constant 0 : index
    %c0_3 = arith.constant 0 : index
    %2 = vector.load %arg1[%c0_1, %c0_2, %c0_3] : memref<2x32x256xbf16, #tpu.memory_space<vmem>>, vector<1x32x256xbf16>
    %3 = vector.shape_cast %2 : vector<1x32x256xbf16> to vector<32x256xbf16>
    %cst = arith.constant dense<0.000000e+00> : vector<2x256xf32>
    %4 = tpu.matmul %1, %3, %cst {dimension_numbers = #tpu.dot_dimension_numbers<[1], [0], [0], [1], [0, 0, 1, 1], [], []>} : vector<2x32xbf16>, vector<32x256xbf16>, vector<2x256xf32> -> vector<2x256xf32>
    %c0_4 = arith.constant 0 : index
    %c0_5 = arith.constant 0 : index
    %c0_6 = arith.constant 0 : index
    %5 = vector.load %arg2[%c0_4, %c0_5, %c0_6] : memref<2x1x256xf32, #tpu.memory_space<vmem>>, vector<1x1x256xf32>
    %6 = vector.shape_cast %5 : vector<1x1x256xf32> to vector<1x256xf32>
    %7 = vector.broadcast %6 : vector<1x256xf32> to vector<2x256xf32>
    %8 = arith.addf %4, %7 : vector<2x256xf32>
    %9 = vector.extract_strided_slice %8 {offsets = [0, 0], sizes = [2, 32], strides = [1, 1]} : vector<2x256xf32> to vector<2x32xf32>
    %10 = arith.negf %9 : vector<2x32xf32>
    %11 = math.exp %10 : vector<2x32xf32>
    %cst_7 = arith.constant 1.000000e+00 : f32
    %12 = vector.broadcast %cst_7 : f32 to vector<2x32xf32>
    %13 = arith.addf %12, %11 : vector<2x32xf32>
    %14 = arith.divf %12, %13 : vector<2x32xf32>
    %15 = vector.extract_strided_slice %8 {offsets = [0, 32], sizes = [2, 32], strides = [1, 1]} : vector<2x256xf32> to vector<2x32xf32>
    %16 = arith.negf %15 : vector<2x32xf32>
    %17 = math.exp %16 : vector<2x32xf32>
    %cst_8 = arith.constant 1.000000e+00 : f32
    %18 = vector.broadcast %cst_8 : f32 to vector<2x32xf32>
    %19 = arith.addf %18, %17 : vector<2x32xf32>
    %20 = arith.divf %18, %19 : vector<2x32xf32>
    %21 = vector.extract_strided_slice %8 {offsets = [0, 64], sizes = [2, 32], strides = [1, 1]} : vector<2x256xf32> to vector<2x32xf32>
    %22 = vector.extract_strided_slice %8 {offsets = [0, 96], sizes = [2, 32], strides = [1, 1]} : vector<2x256xf32> to vector<2x32xf32>
    %23 = arith.mulf %14, %22 : vector<2x32xf32>
    %24 = arith.addf %21, %23 : vector<2x32xf32>
    %25 = math.tanh %24 : vector<2x32xf32>
    %cst_9 = arith.constant 1.000000e+00 : f32
    %26 = vector.broadcast %cst_9 : f32 to vector<2x32xf32>
    %27 = arith.subf %26, %20 : vector<2x32xf32>
    %28 = arith.mulf %27, %25 : vector<2x32xf32>
    %29 = arith.mulf %20, %0 : vector<2x32xf32>
    %30 = arith.addf %28, %29 : vector<2x32xf32>
    %31 = vector.extract_strided_slice %8 {offsets = [0, 128], sizes = [2, 32], strides = [1, 1]} : vector<2x256xf32> to vector<2x32xf32>
    %32 = arith.negf %31 : vector<2x32xf32>
    %33 = math.exp %32 : vector<2x32xf32>
    %cst_10 = arith.constant 1.000000e+00 : f32
    %34 = vector.broadcast %cst_10 : f32 to vector<2x32xf32>
    %35 = arith.addf %34, %33 : vector<2x32xf32>
    %36 = arith.divf %34, %35 : vector<2x32xf32>
    %37 = vector.extract_strided_slice %8 {offsets = [0, 160], sizes = [2, 32], strides = [1, 1]} : vector<2x256xf32> to vector<2x32xf32>
    %38 = arith.negf %37 : vector<2x32xf32>
    %39 = math.exp %38 : vector<2x32xf32>
    %cst_11 = arith.constant 1.000000e+00 : f32
    %40 = vector.broadcast %cst_11 : f32 to vector<2x32xf32>
    %41 = arith.addf %40, %39 : vector<2x32xf32>
    %42 = arith.divf %40, %41 : vector<2x32xf32>
    %43 = vector.extract_strided_slice %8 {offsets = [0, 192], sizes = [2, 32], strides = [1, 1]} : vector<2x256xf32> to vector<2x32xf32>
    %44 = vector.extract_strided_slice %8 {offsets = [0, 224], sizes = [2, 32], strides = [1, 1]} : vector<2x256xf32> to vector<2x32xf32>
    %45 = arith.mulf %36, %44 : vector<2x32xf32>
    %46 = arith.addf %43, %45 : vector<2x32xf32>
    %47 = math.tanh %46 : vector<2x32xf32>
    %cst_12 = arith.constant 1.000000e+00 : f32
    %48 = vector.broadcast %cst_12 : f32 to vector<2x32xf32>
    %49 = arith.subf %48, %42 : vector<2x32xf32>
    %50 = arith.mulf %49, %47 : vector<2x32xf32>
    %51 = arith.mulf %42, %0 : vector<2x32xf32>
    %52 = arith.addf %50, %51 : vector<2x32xf32>
    %53 = tpu.concatenate %30, %52 in 0 : vector<2x32xf32>, vector<2x32xf32> -> vector<4x32xf32>
    %54 = arith.truncf %53 : vector<4x32xf32> to vector<4x32xbf16>
    %c1 = arith.constant 1 : index
    %c0_13 = arith.constant 0 : index
    %c0_14 = arith.constant 0 : index
    %55 = vector.load %arg1[%c1, %c0_13, %c0_14] : memref<2x32x256xbf16, #tpu.memory_space<vmem>>, vector<1x32x256xbf16>
    %56 = vector.shape_cast %55 : vector<1x32x256xbf16> to vector<32x256xbf16>
    %cst_15 = arith.constant dense<0.000000e+00> : vector<4x256xf32>
    %57 = tpu.matmul %54, %56, %cst_15 {dimension_numbers = #tpu.dot_dimension_numbers<[1], [0], [0], [1], [0, 0, 1, 1], [], []>} : vector<4x32xbf16>, vector<32x256xbf16>, vector<4x256xf32> -> vector<4x256xf32>
    %c1_16 = arith.constant 1 : index
    %c0_17 = arith.constant 0 : index
    %c0_18 = arith.constant 0 : index
    %58 = vector.load %arg2[%c1_16, %c0_17, %c0_18] : memref<2x1x256xf32, #tpu.memory_space<vmem>>, vector<1x1x256xf32>
    %59 = vector.shape_cast %58 : vector<1x1x256xf32> to vector<1x256xf32>
    %60 = vector.broadcast %59 : vector<1x256xf32> to vector<4x256xf32>
    %61 = arith.addf %57, %60 : vector<4x256xf32>
    %62 = vector.extract_strided_slice %61 {offsets = [0, 0], sizes = [4, 32], strides = [1, 1]} : vector<4x256xf32> to vector<4x32xf32>
    %63 = arith.negf %62 : vector<4x32xf32>
    %64 = math.exp %63 : vector<4x32xf32>
    %cst_19 = arith.constant 1.000000e+00 : f32
    %65 = vector.broadcast %cst_19 : f32 to vector<4x32xf32>
    %66 = arith.addf %65, %64 : vector<4x32xf32>
    %67 = arith.divf %65, %66 : vector<4x32xf32>
    %68 = vector.extract_strided_slice %61 {offsets = [0, 32], sizes = [4, 32], strides = [1, 1]} : vector<4x256xf32> to vector<4x32xf32>
    %69 = arith.negf %68 : vector<4x32xf32>
    %70 = math.exp %69 : vector<4x32xf32>
    %cst_20 = arith.constant 1.000000e+00 : f32
    %71 = vector.broadcast %cst_20 : f32 to vector<4x32xf32>
    %72 = arith.addf %71, %70 : vector<4x32xf32>
    %73 = arith.divf %71, %72 : vector<4x32xf32>
    %74 = vector.extract_strided_slice %61 {offsets = [0, 64], sizes = [4, 32], strides = [1, 1]} : vector<4x256xf32> to vector<4x32xf32>
    %75 = vector.extract_strided_slice %61 {offsets = [0, 96], sizes = [4, 32], strides = [1, 1]} : vector<4x256xf32> to vector<4x32xf32>
    %76 = arith.mulf %67, %75 : vector<4x32xf32>
    %77 = arith.addf %74, %76 : vector<4x32xf32>
    %78 = math.tanh %77 : vector<4x32xf32>
    %cst_21 = arith.constant 1.000000e+00 : f32
    %79 = vector.broadcast %cst_21 : f32 to vector<4x32xf32>
    %80 = arith.subf %79, %73 : vector<4x32xf32>
    %81 = arith.mulf %80, %78 : vector<4x32xf32>
    %82 = arith.mulf %73, %53 : vector<4x32xf32>
    %83 = arith.addf %81, %82 : vector<4x32xf32>
    %84 = vector.extract_strided_slice %83 {offsets = [0, 0], sizes = [2, 32], strides = [1, 1]} : vector<4x32xf32> to vector<2x32xf32>
    %c0_22 = arith.constant 0 : index
    %c0_23 = arith.constant 0 : index
    %c0_24 = arith.constant 0 : index
    %85 = vector.load %arg5[%c0_22, %c0_23, %c0_24] : memref<4x2x32xf32, #tpu.memory_space<vmem>>, vector<1x2x32xf32>
    %86 = vector.shape_cast %85 : vector<1x2x32xf32> to vector<2x32xf32>
    %87 = vector.shape_cast %84 : vector<2x32xf32> to vector<1x2x32xf32>
    tpu.vector_store %arg5[%c0_22, %c0_23, %c0_24], %87 {strides = array<i32>} : memref<4x2x32xf32, #tpu.memory_space<vmem>>, vector<1x2x32xf32>,
    %88 = vector.extract_strided_slice %83 {offsets = [2, 0], sizes = [2, 32], strides = [1, 1]} : vector<4x32xf32> to vector<2x32xf32>
    %c2 = arith.constant 2 : index
    %c0_25 = arith.constant 0 : index
    %c0_26 = arith.constant 0 : index
    %89 = vector.load %arg5[%c2, %c0_25, %c0_26] : memref<4x2x32xf32, #tpu.memory_space<vmem>>, vector<1x2x32xf32>
    %90 = vector.shape_cast %89 : vector<1x2x32xf32> to vector<2x32xf32>
    %91 = vector.shape_cast %88 : vector<2x32xf32> to vector<1x2x32xf32>
    tpu.vector_store %arg5[%c2, %c0_25, %c0_26], %91 {strides = array<i32>} : memref<4x2x32xf32, #tpu.memory_space<vmem>>, vector<1x2x32xf32>,
    %92 = vector.extract_strided_slice %61 {offsets = [0, 128], sizes = [4, 32], strides = [1, 1]} : vector<4x256xf32> to vector<4x32xf32>
    %93 = arith.negf %92 : vector<4x32xf32>
    %94 = math.exp %93 : vector<4x32xf32>
    %cst_27 = arith.constant 1.000000e+00 : f32
    %95 = vector.broadcast %cst_27 : f32 to vector<4x32xf32>
    %96 = arith.addf %95, %94 : vector<4x32xf32>
    %97 = arith.divf %95, %96 : vector<4x32xf32>
    %98 = vector.extract_strided_slice %61 {offsets = [0, 160], sizes = [4, 32], strides = [1, 1]} : vector<4x256xf32> to vector<4x32xf32>
    %99 = arith.negf %98 : vector<4x32xf32>
    %100 = math.exp %99 : vector<4x32xf32>
    %cst_28 = arith.constant 1.000000e+00 : f32
    %101 = vector.broadcast %cst_28 : f32 to vector<4x32xf32>
    %102 = arith.addf %101, %100 : vector<4x32xf32>
    %103 = arith.divf %101, %102 : vector<4x32xf32>
    %104 = vector.extract_strided_slice %61 {offsets = [0, 192], sizes = [4, 32], strides = [1, 1]} : vector<4x256xf32> to vector<4x32xf32>
    %105 = vector.extract_strided_slice %61 {offsets = [0, 224], sizes = [4, 32], strides = [1, 1]} : vector<4x256xf32> to vector<4x32xf32>
    %106 = arith.mulf %97, %105 : vector<4x32xf32>
    %107 = arith.addf %104, %106 : vector<4x32xf32>
    %108 = math.tanh %107 : vector<4x32xf32>
    %cst_29 = arith.constant 1.000000e+00 : f32
    %109 = vector.broadcast %cst_29 : f32 to vector<4x32xf32>
    %110 = arith.subf %109, %103 : vector<4x32xf32>
    %111 = arith.mulf %110, %108 : vector<4x32xf32>
    %112 = arith.mulf %103, %53 : vector<4x32xf32>
    %113 = arith.addf %111, %112 : vector<4x32xf32>
    %114 = vector.extract_strided_slice %113 {offsets = [0, 0], sizes = [2, 32], strides = [1, 1]} : vector<4x32xf32> to vector<2x32xf32>
    %c1_30 = arith.constant 1 : index
    %c0_31 = arith.constant 0 : index
    %c0_32 = arith.constant 0 : index
    %115 = vector.load %arg5[%c1_30, %c0_31, %c0_32] : memref<4x2x32xf32, #tpu.memory_space<vmem>>, vector<1x2x32xf32>
    %116 = vector.shape_cast %115 : vector<1x2x32xf32> to vector<2x32xf32>
    %117 = vector.shape_cast %114 : vector<2x32xf32> to vector<1x2x32xf32>
    tpu.vector_store %arg5[%c1_30, %c0_31, %c0_32], %117 {strides = array<i32>} : memref<4x2x32xf32, #tpu.memory_space<vmem>>, vector<1x2x32xf32>,
    %118 = vector.extract_strided_slice %113 {offsets = [2, 0], sizes = [2, 32], strides = [1, 1]} : vector<4x32xf32> to vector<2x32xf32>
    %c3 = arith.constant 3 : index
    %c0_33 = arith.constant 0 : index
    %c0_34 = arith.constant 0 : index
    %119 = vector.load %arg5[%c3, %c0_33, %c0_34] : memref<4x2x32xf32, #tpu.memory_space<vmem>>, vector<1x2x32xf32>
    %120 = vector.shape_cast %119 : vector<1x2x32xf32> to vector<2x32xf32>
    %121 = vector.shape_cast %118 : vector<2x32xf32> to vector<1x2x32xf32>
    tpu.vector_store %arg5[%c3, %c0_33, %c0_34], %121 {strides = array<i32>} : memref<4x2x32xf32, #tpu.memory_space<vmem>>, vector<1x2x32xf32>,
    %c0_35 = arith.constant 0 : index
    %c0_36 = arith.constant 0 : index
    %c0_37 = arith.constant 0 : index
    %122 = vector.load %arg5[%c0_35, %c0_36, %c0_37] : memref<4x2x32xf32, #tpu.memory_space<vmem>>, vector<4x2x32xf32>
    %123 = arith.truncf %122 : vector<4x2x32xf32> to vector<4x2x32xbf16>
    %c0_38 = arith.constant 0 : index
    %c0_39 = arith.constant 0 : index
    %c0_40 = arith.constant 0 : index
    %124 = vector.load %arg3[%c0_38, %c0_39, %c0_40] : memref<4x32x128xbf16, #tpu.memory_space<vmem>>, vector<4x32x128xbf16>
    "tpu.trace_start"() <{level = 10 : i32, message = "lbh,lho->lbo"}> : () -> ()
    %cst_41 = arith.constant dense<0.000000e+00> : vector<4x2x128xf32>
    %125 = tpu.matmul %123, %124, %cst_41 {dimension_numbers = #tpu.dot_dimension_numbers<[2], [1], [1], [2], [0, 0, 0, 1, 1, 2], [0], [0]>} : vector<4x2x32xbf16>, vector<4x32x128xbf16>, vector<4x2x128xf32> -> vector<4x2x128xf32>
    "tpu.trace_stop"() : () -> ()
    %126 = tpu.iota {dimensions = array<i32: 2>} : vector<4x2x128xi32>
    %c64_i32 = arith.constant 64 : i32
    %127 = vector.broadcast %c64_i32 : i32 to vector<4x2x128xi32>
    %128 = arith.cmpi slt, %126, %127 : vector<4x2x128xi32>
    %cst_42 = arith.constant -1.000000e+30 : f32
    %129 = vector.broadcast %cst_42 : f32 to vector<4x2x128xf32>
    %130 = arith.select %128, %125, %129 : vector<4x2x128xi1>, vector<4x2x128xf32>
    %cst_43 = arith.constant dense<0xFF800000> : vector<4x2xf32>
    %131 = vector.multi_reduction <maximumf>, %130, %cst_43 [2] : vector<4x2x128xf32> to vector<4x2xf32>
    %132 = vector.shape_cast %131 : vector<4x2xf32> to vector<4x2x1xf32>
    %133 = vector.broadcast %132 : vector<4x2x1xf32> to vector<4x2x128xf32>
    %134 = arith.subf %130, %133 : vector<4x2x128xf32>
    %135 = math.exp %134 : vector<4x2x128xf32>
    %cst_44 = arith.constant dense<0.000000e+00> : vector<4x2xf32>
    %136 = vector.multi_reduction <add>, %135, %cst_44 [2] : vector<4x2x128xf32> to vector<4x2xf32>
    %137 = vector.shape_cast %136 : vector<4x2xf32> to vector<4x2x1xf32>
    %138 = vector.broadcast %137 : vector<4x2x1xf32> to vector<4x2x128xf32>
    %139 = arith.divf %135, %138 : vector<4x2x128xf32>
    %c0_45 = arith.constant 0 : index
    %c0_46 = arith.constant 0 : index
    %c0_47 = arith.constant 0 : index
    %140 = vector.load %arg4[%c0_45, %c0_46, %c0_47] : memref<4x2x128xf32, #tpu.memory_space<vmem>>, vector<4x2x128xf32>
    tpu.vector_store %arg4[%c0_45, %c0_46, %c0_47], %139 {strides = array<i32>} : memref<4x2x128xf32, #tpu.memory_space<vmem>>, vector<4x2x128xf32>,
    return
  }
}

</mosaic_0001>

<llo_original>
// kernel: tpu_custom_call.1
$region0: #{tpu_custom_call.1}
  #allocation0 [shape = 'u32[]', space=smem, size = 0x4, offset = 0x4, fixed_abs, tag = 'smem constant byte address 0x4 - core index']
  #allocation1 [shape = 'u32[144,128]{1,0:T(1,128)}', space=vmem, size = 0x12000, scoped, tag = 'internal scratch']
  #allocation2 [shape = 'f32[4,2,32]{2,1,0:T(2,128)}', space=vmem, size = 0x1000, scoped, tag = 'scratch operand']
  %s0 = inlined_call_operand.hbm [shape: f32[2,32], index: 0, kind: input, shape index: {}]
  %s1 = inlined_call_operand.hbm [shape: bf16[2,32,256], index: 1, kind: input, shape index: {}]
  %s2 = inlined_call_operand.vmem [shape: f32[2,1,256], index: 2, kind: input, shape index: {}]
  %s3 = inlined_call_operand.hbm [shape: bf16[4,32,128], index: 3, kind: input, shape index: {}]
  %s4 = inlined_call_operand.hbm [shape: f32[4,2,128], index: 4, kind: output, shape index: {}]
  %s5 = sld [smem:[#allocation0]]
  $region38: #{tpu_custom_call.1} parent=0
    _
  %s7 = ssub.s32 1, %s5
  %s8 = scalar_select 0, %s7, %s5
  $region1: #{tpu_custom_call.1} parent=0
    #allocation3 [shape = 'u8[1024]{0}', space=vmem, size = 0x400, scoped, tag = 'input window, operand 0, single buffered']
    #allocation4 [shape = 's32[1]{0}', space=sflag, size = 0x4, scoped, tag = 'scoped memory for tpu_custom_call.1']
    #allocation5 [shape = 's32[1]{0}', space=sflag, size = 0x4, scoped, tag = 'scoped memory for tpu_custom_call.1']
    #allocation6 [shape = 'u8[32768]{0}', space=vmem, size = 0x8000, scoped, tag = 'input window, operand 1, single buffered']
    #allocation7 [shape = 's32[1]{0}', space=sflag, size = 0x4, scoped, tag = 'scoped memory for tpu_custom_call.1']
    #allocation8 [shape = 'u8[32768]{0}', space=vmem, size = 0x8000, scoped, tag = 'input window, operand 3, single buffered']
    #allocation9 [shape = 'u8[4096]{0}', space=vmem, size = 0x1000, scoped, tag = 'output window, operand 0, single buffered']
    %9 = vsyncpa [#allocation4], 0
    %10 = vsyncpa [#allocation7], 0
    %11 = vsyncpa [#allocation5], 0
    // Predicated region
    $region2: #{tpu_custom_call.1} parent=1 // pred_check
      _
    $region3: #{tpu_custom_call.1} parent=1 // pred_check_branch
      %13 = sbr.rel (0) target = $region5
    $region4: #{tpu_custom_call.1} parent=1 // pred_region
      %s15 = ssub.s32 32, 32
      %16 = vsyncadd [#allocation4], %s15
      %s18 = sshll.u32 [#allocation3], 4
      %s19 = int_to_ptr.vmem [resolvable:$true] %s18
      %21 = dma.hbm_to_vmem [thread:$0]  %s0, 32, %s19, [#allocation4]
    $region5: #{tpu_custom_call.1} parent=1 // pred_fallthru
      _
    // Predicated region
    $region6: #{tpu_custom_call.1} parent=1 // pred_check
      _
    $region7: #{tpu_custom_call.1} parent=1 // pred_check_branch
      %23 = sbr.rel (0) target = $region9
    $region8: #{tpu_custom_call.1} parent=1 // pred_region
      %s25 = ssub.s32 1024, 1024
      %26 = vsyncadd [#allocation7], %s25
      %s27 = sshll.u32 [#allocation6], 4
      %s28 = int_to_ptr.vmem [resolvable:$true] %s27
      %33 = dma.hbm_to_vmem [thread:$0]  %s1, 1024, %s28, [#allocation7], 128, 128, 8
    $region9: #{tpu_custom_call.1} parent=1 // pred_fallthru
      _
    // Predicated region
    $region10: #{tpu_custom_call.1} parent=1 // pred_check
      _
    $region11: #{tpu_custom_call.1} parent=1 // pred_check_branch
      %35 = sbr.rel (0) target = $region13
    $region12: #{tpu_custom_call.1} parent=1 // pred_region
      _
    $region13: #{tpu_custom_call.1} parent=1 // pred_fallthru
      _
    // Predicated region
    $region14: #{tpu_custom_call.1} parent=1 // pred_check
      _
    $region15: #{tpu_custom_call.1} parent=1 // pred_check_branch
      %37 = sbr.rel (0) target = $region17
    $region16: #{tpu_custom_call.1} parent=1 // pred_region
      %s39 = ssub.s32 1024, 1024
      %40 = vsyncadd [#allocation7], %s39
      %s41 = sshll.u32 [#allocation8], 4
      %s42 = int_to_ptr.vmem [resolvable:$true] %s41
      %47 = dma.hbm_to_vmem [thread:$0]  %s3, 1024, %s42, [#allocation7], 64, 64, 4
    $region17: #{tpu_custom_call.1} parent=1 // pred_fallthru
      _
    // Predicated region
    $region18: #{tpu_custom_call.1} parent=1 // pred_check
      _
    $region19: #{tpu_custom_call.1} parent=1 // pred_check_branch
      %49 = sbr.rel (0) target = $region21
    $region20: #{tpu_custom_call.1} parent=1 // pred_region
      %50 = dma.done [#allocation4], 32
    $region21: #{tpu_custom_call.1} parent=1 // pred_fallthru
      _
    // Predicated region
    $region22: #{tpu_custom_call.1} parent=1 // pred_check
      _
    $region23: #{tpu_custom_call.1} parent=1 // pred_check_branch
      %52 = sbr.rel (0) target = $region25
    $region24: #{tpu_custom_call.1} parent=1 // pred_region
      %53 = dma.done [#allocation7], 1024
    $region25: #{tpu_custom_call.1} parent=1 // pred_fallthru
      _
    // Predicated region
    $region26: #{tpu_custom_call.1} parent=1 // pred_check
      _
    $region27: #{tpu_custom_call.1} parent=1 // pred_check_branch
      %55 = sbr.rel (0) target = $region29
    $region28: #{tpu_custom_call.1} parent=1 // pred_region
      %56 = dma.done [#allocation7], 1024
    $region29: #{tpu_custom_call.1} parent=1 // pred_fallthru
      _
    %v58 = vld [vmem:[#allocation3] sm:$0x3]
    %v59 = vpack.c.bf16 %v58, %v58
    %v60 = vld [vmem:[#allocation6] sm:$0xff]
    %v61 = vld [vmem:[#allocation6 + $0x8] sm:$0xff]
    %v62 = vld [vmem:[#allocation6 + $0x10] sm:$0xff]
    %v63 = vld [vmem:[#allocation6 + $0x18] sm:$0xff]
    %v64 = vld [vmem:[%s2] sm:$0x3]
    %v66 = vlaneseq
    %v67 = vshrl.u32 %v66, 7
    %v68 = vsub.s32 0, %v67
    %v69 = vrot.slane %v64, %v68
    %v70 = vlaneseq
    %v71 = vshrl.u32 %v70, 7
    %v72 = vsub.s32 1, %v71
    %v73 = vrot.slane %v64, %v72
    %v80 = vunpack.c.l.b16 %v60
    %v81 = vunpack.c.h.b16 %v60
    %v82 = vunpack.c.l.b16 %v61
    %v83 = vunpack.c.h.b16 %v61
    %v84 = vunpack.c.l.b16 %v62
    %v85 = vunpack.c.h.b16 %v62
    %v86 = vunpack.c.l.b16 %v63
    %v87 = vunpack.c.h.b16 %v63
    %v88 = vpack.c.b16 %v82, %v80
    %v89 = vpack.c.b16 %v83, %v81
    %v90 = vpack.c.b16 %v86, %v84
    %v91 = vpack.c.b16 %v87, %v85
    %vm96 = vcmask 261120
    %v98 = vsel %vm96, %v59, 0
    %100 = vmatprep.subr.bf16.mxu0 %v89
    %101 = vmatpush1.bf16.msra.mxu0 %v88
    %102 = vmatprep.subr.bf16.mxu0 %v91
    %103 = vmatpush1.bf16.msra.mxu0 %v90
    %104 = vmatprep.subr.bf16.mxu0 0
    %105 = vmatpush1.bf16.msra.mxu0 0
    %106 = vmatprep.subr.bf16.mxu0 0
    %107 = vmatpush1.bf16.msra.mxu0 0
    %108 = vmatprep.subr.bf16.mxu0 0
    %109 = vmatpush1.bf16.msra.mxu0 0
    %110 = vmatprep.subr.bf16.mxu0 0
    %111 = vmatpush1.bf16.msra.mxu0 0
    %112 = vmatprep.subr.bf16.mxu0 0
    %113 = vmatpush1.bf16.msra.mxu0 0
    %114 = vmatprep.subr.bf16.mxu0 0
    %115 = vmatpush1.bf16.msra.mxu0 0
    %116 = vmatprep.subr.bf16.mxu0 0
    %117 = vmatpush1.bf16.msra.mxu0 0
    %118 = vmatprep.subr.bf16.mxu0 0
    %119 = vmatpush1.bf16.msra.mxu0 0
    %120 = vmatprep.subr.bf16.mxu0 0
    %121 = vmatpush1.bf16.msra.mxu0 0
    %122 = vmatprep.subr.bf16.mxu0 0
    %123 = vmatpush1.bf16.msra.mxu0 0
    %124 = vmatprep.subr.bf16.mxu0 0
    %125 = vmatpush1.bf16.msra.mxu0 0
    %126 = vmatprep.subr.bf16.mxu0 0
    %127 = vmatpush1.bf16.msra.mxu0 0
    %128 = vmatprep.subr.bf16.mxu0 0
    %129 = vmatpush1.bf16.msra.mxu0 0
    %130 = vmatprep.subr.bf16.mxu0 0
    %131 = vmatpush1.bf16.msra.mxu0 0
    %132 = vmatprep.mubr.bf16.mxu0 0
    %133 = vmatmul.mubr.bf16.gmra.mrb[0].mxu0 %v98
    %v134 = vpop.f32.mrb[0].mxu0
    %v135 = vadd.f32 %v69, %v134
    %v136 = vpop.f32.mrb[0].mxu0
    %v137 = vadd.f32 %v73, %v136
    %v138 = vpop.f32.mrb[0].mxu0
    %v139 = vpop.f32.mrb[0].mxu0
    %140 = vdwg.mxu0
    %v141 = vxor.u32 %v135, 2147483648
    %v142 = vmul.f32 %v141, 1.442695
    %v143 = vpow.pop %v142
    %v144 = vadd.f32 %v143, 1.0
    %v145 = vrcp.pop %v144
    %v146 = vmul.f32 1.0, %v145
    %148 = vrot.lane.b32.xlu0 %v135, 32
    %v149 = vpop.permute.xlu0 %148
    %v151 = vmul.f32 %v146, %v149
    %153 = vrot.lane.b32.xlu0 %v151, 64
    %v154 = vpop.permute.xlu0 %153
    %v156 = vadd.f32 %v135, %v154
    %v157 = vtanh.pop %v156
    %v158 = vsub.f32 1.0, %v146
    %160 = vrot.lane.b32.xlu0 %v157, 96
    %v161 = vpop.permute.xlu0 %160
    %v163 = vmul.f32 %v158, %v161
    %165 = vrot.lane.b32.xlu0 %v58, 32
    %v166 = vpop.permute.xlu0 %165
    %v168 = vmul.f32 %v146, %v166
    %v169 = vadd.f32 %v163, %v168
    %v170 = vxor.u32 %v137, 2147483648
    %v171 = vmul.f32 %v170, 1.442695
    %v172 = vpow.pop %v171
    %v173 = vadd.f32 %v172, 1.0
    %v174 = vrcp.pop %v173
    %v175 = vmul.f32 1.0, %v174
    %177 = vrot.lane.b32.xlu0 %v137, 32
    %v178 = vpop.permute.xlu0 %177
    %v180 = vmul.f32 %v175, %v178
    %182 = vrot.lane.b32.xlu0 %v180, 64
    %v183 = vpop.permute.xlu0 %182
    %v185 = vadd.f32 %v137, %v183
    %v186 = vtanh.pop %v185
    %v187 = vsub.f32 1.0, %v175
    %189 = vrot.lane.b32.xlu0 %v186, 96
    %v190 = vpop.permute.xlu0 %189
    %v192 = vmul.f32 %v187, %v190
    %v193 = vmul.f32 %v175, %v166
    %v194 = vadd.f32 %v192, %v193
    %v196 = vrot.slane %v194, 6
    %vm198 = vcmask 1041408
    %v199 = vsel %vm198, %v169, %v196
    %v200 = vpack.c.bf16 %v199, %v199
    %s201 = scalar_lea.vmem [#allocation6], 32
    %v202 = vld [vmem:[%s201] sm:$0xff]
    %v203 = vld [vmem:[%s201 + $0x8] sm:$0xff]
    %v204 = vld [vmem:[%s201 + $0x10] sm:$0xff]
    %v205 = vld [vmem:[%s201 + $0x18] sm:$0xff]
    %s206 = scalar_lea.vmem %s2, 2
    %v207 = vld [vmem:[%s206] sm:$0x3]
    %v209 = vlaneseq
    %v210 = vshrl.u32 %v209, 7
    %v211 = vsub.s32 0, %v210
    %v212 = vrot.slane %v207, %v211
    %v213 = vlaneseq
    %v214 = vshrl.u32 %v213, 7
    %v215 = vsub.s32 1, %v214
    %v216 = vrot.slane %v207, %v215
    %220 = vrot.lane.b32.xlu0 %v200, 96
    %v221 = vpop.permute.xlu0 %220
    %v226 = vunpack.c.l.b16 %v202
    %v227 = vunpack.c.h.b16 %v202
    %v228 = vunpack.c.l.b16 %v203
    %v229 = vunpack.c.h.b16 %v203
    %v230 = vunpack.c.l.b16 %v204
    %v231 = vunpack.c.h.b16 %v204
    %v232 = vunpack.c.l.b16 %v205
    %v233 = vunpack.c.h.b16 %v205
    %v234 = vpack.c.b16 %v228, %v226
    %v235 = vpack.c.b16 %v229, %v227
    %v236 = vpack.c.b16 %v232, %v230
    %v237 = vpack.c.b16 %v233, %v231
    %v243 = vsel %vm96, %v221, 0
    %245 = vmatprep.subr.bf16.mxu0 %v235
    %246 = vmatpush1.bf16.msra.mxu0 %v234
    %247 = vmatprep.subr.bf16.mxu0 %v237
    %248 = vmatpush1.bf16.msra.mxu0 %v236
    %249 = vmatprep.subr.bf16.mxu0 0
    %250 = vmatpush1.bf16.msra.mxu0 0
    %251 = vmatprep.subr.bf16.mxu0 0
    %252 = vmatpush1.bf16.msra.mxu0 0
    %253 = vmatprep.subr.bf16.mxu0 0
    %254 = vmatpush1.bf16.msra.mxu0 0
    %255 = vmatprep.subr.bf16.mxu0 0
    %256 = vmatpush1.bf16.msra.mxu0 0
    %257 = vmatprep.subr.bf16.mxu0 0
    %258 = vmatpush1.bf16.msra.mxu0 0
    %259 = vmatprep.subr.bf16.mxu0 0
    %260 = vmatpush1.bf16.msra.mxu0 0
    %261 = vmatprep.subr.bf16.mxu0 0
    %262 = vmatpush1.bf16.msra.mxu0 0
    %263 = vmatprep.subr.bf16.mxu0 0
    %264 = vmatpush1.bf16.msra.mxu0 0
    %265 = vmatprep.subr.bf16.mxu0 0
    %266 = vmatpush1.bf16.msra.mxu0 0
    %267 = vmatprep.subr.bf16.mxu0 0
    %268 = vmatpush1.bf16.msra.mxu0 0
    %269 = vmatprep.subr.bf16.mxu0 0
    %270 = vmatpush1.bf16.msra.mxu0 0
    %271 = vmatprep.subr.bf16.mxu0 0
    %272 = vmatpush1.bf16.msra.mxu0 0
    %273 = vmatprep.subr.bf16.mxu0 0
    %274 = vmatpush1.bf16.msra.mxu0 0
    %275 = vmatprep.subr.bf16.mxu0 0
    %276 = vmatpush1.bf16.msra.mxu0 0
    %277 = vmatprep.mubr.bf16.mxu0 0
    %278 = vmatmul.mubr.bf16.gmra.mrb[0].mxu0 %v243
    %v279 = vpop.f32.mrb[0].mxu0
    %v280 = vadd.f32 %v212, %v279
    %v281 = vpop.f32.mrb[0].mxu0
    %v282 = vadd.f32 %v216, %v281
    %v283 = vpop.f32.mrb[0].mxu0
    %v284 = vpop.f32.mrb[0].mxu0
    %285 = vdwg.mxu0
    %v286 = vxor.u32 %v280, 2147483648
    %v287 = vmul.f32 %v286, 1.442695
    %v288 = vpow.pop %v287
    %v289 = vadd.f32 %v288, 1.0
    %v290 = vrcp.pop %v289
    %v291 = vmul.f32 1.0, %v290
    %293 = vrot.lane.b32.xlu0 %v280, 32
    %v294 = vpop.permute.xlu0 %293
    %v296 = vmul.f32 %v291, %v294
    %298 = vrot.lane.b32.xlu0 %v296, 64
    %v299 = vpop.permute.xlu0 %298
    %v301 = vadd.f32 %v280, %v299
    %v302 = vtanh.pop %v301
    %v303 = vsub.f32 1.0, %v291
    %305 = vrot.lane.b32.xlu0 %v302, 96
    %v306 = vpop.permute.xlu0 %305
    %v308 = vmul.f32 %v303, %v306
    %v309 = vmul.f32 %v291, %v199
    %v310 = vadd.f32 %v308, %v309
    %312 = vrot.lane.b32.xlu0 %v310, 96
    %v313 = vpop.permute.xlu0 %312
    %vm315 = vcmask 254976
    %316 = vst.msk [vmem:[#allocation2] sm:$0x3] %vm315, %v313
    %s317 = scalar_lea.vmem [#allocation2], 4
    %vm318 = vcmask 257026
    %319 = vst.msk [vmem:[%s317 - $0x2] sm:$0xc] %vm318, %v313
    %v320 = vxor.u32 %v282, 2147483648
    %v321 = vmul.f32 %v320, 1.442695
    %v322 = vpow.pop %v321
    %v323 = vadd.f32 %v322, 1.0
    %v324 = vrcp.pop %v323
    %v325 = vmul.f32 1.0, %v324
    %327 = vrot.lane.b32.xlu0 %v282, 32
    %v328 = vpop.permute.xlu0 %327
    %v330 = vmul.f32 %v325, %v328
    %332 = vrot.lane.b32.xlu0 %v330, 64
    %v333 = vpop.permute.xlu0 %332
    %v335 = vadd.f32 %v282, %v333
    %v336 = vtanh.pop %v335
    %v337 = vsub.f32 1.0, %v325
    %339 = vrot.lane.b32.xlu0 %v336, 96
    %v340 = vpop.permute.xlu0 %339
    %v342 = vmul.f32 %v337, %v340
    %v343 = vmul.f32 %v325, %v199
    %v344 = vadd.f32 %v342, %v343
    %346 = vrot.lane.b32.xlu0 %v344, 96
    %v347 = vpop.permute.xlu0 %346
    %s349 = scalar_lea.vmem [#allocation2], 2
    %350 = vst.msk [vmem:[%s349] sm:$0x3] %vm315, %v347
    %s351 = scalar_lea.vmem [#allocation2], 6
    %352 = vst.msk [vmem:[%s351 - $0x2] sm:$0xc] %vm318, %v347
    %v353 = vld [vmem:[#allocation2] sm:$0x3]
    %v354 = vld [vmem:[#allocation2 + $0x2] sm:$0x3]
    %v355 = vld [vmem:[#allocation2 + $0x4] sm:$0x3]
    %v356 = vld [vmem:[#allocation2 + $0x6] sm:$0x3]
    %v357 = vpack.c.bf16 %v353, %v353
    %v358 = vpack.c.bf16 %v354, %v354
    %v359 = vpack.c.bf16 %v355, %v355
    %v360 = vpack.c.bf16 %v356, %v356
    %v361 = vld [vmem:[#allocation8] sm:$0xf]
    %v362 = vld [vmem:[#allocation8 + $0x4] sm:$0xf]
    %v363 = vld [vmem:[#allocation8 + $0x8] sm:$0xf]
    %v364 = vld [vmem:[#allocation8 + $0xc] sm:$0xf]
    %v365 = vld [vmem:[#allocation8 + $0x10] sm:$0xf]
    %v366 = vld [vmem:[#allocation8 + $0x14] sm:$0xf]
    %v367 = vld [vmem:[#allocation8 + $0x18] sm:$0xf]
    %v368 = vld [vmem:[#allocation8 + $0x1c] sm:$0xf]
    %v369 = vld [vmem:[#allocation8 + $0x20] sm:$0xf]
    %v370 = vld [vmem:[#allocation8 + $0x24] sm:$0xf]
    %v371 = vld [vmem:[#allocation8 + $0x28] sm:$0xf]
    %v372 = vld [vmem:[#allocation8 + $0x2c] sm:$0xf]
    %v373 = vld [vmem:[#allocation8 + $0x30] sm:$0xf]
    %v374 = vld [vmem:[#allocation8 + $0x34] sm:$0xf]
    %v375 = vld [vmem:[#allocation8 + $0x38] sm:$0xf]
    %v376 = vld [vmem:[#allocation8 + $0x3c] sm:$0xf]
    %v381 = vunpack.c.l.b16 %v361
    %v382 = vunpack.c.l.b16 %v362
    %v383 = vunpack.c.l.b16 %v363
    %v384 = vunpack.c.l.b16 %v364
    %v385 = vpack.c.b16 %v382, %v381
    %v386 = vpack.c.b16 %v384, %v383
    %v390 = vsel %vm96, %v357, 0
    %392 = vmatprep.subr.bf16.mxu0 0
    %393 = vmatpush1.bf16.msra.mxu0 %v385
    %394 = vmatprep.subr.bf16.mxu0 0
    %395 = vmatpush1.bf16.msra.mxu0 %v386
    %396 = vmatprep.subr.bf16.mxu0 0
    %397 = vmatpush1.bf16.msra.mxu0 0
    %398 = vmatprep.subr.bf16.mxu0 0
    %399 = vmatpush1.bf16.msra.mxu0 0
    %400 = vmatprep.subr.bf16.mxu0 0
    %401 = vmatpush1.bf16.msra.mxu0 0
    %402 = vmatprep.subr.bf16.mxu0 0
    %403 = vmatpush1.bf16.msra.mxu0 0
    %404 = vmatprep.subr.bf16.mxu0 0
    %405 = vmatpush1.bf16.msra.mxu0 0
    %406 = vmatprep.subr.bf16.mxu0 0
    %407 = vmatpush1.bf16.msra.mxu0 0
    %408 = vmatprep.subr.bf16.mxu0 0
    %409 = vmatpush1.bf16.msra.mxu0 0
    %410 = vmatprep.subr.bf16.mxu0 0
    %411 = vmatpush1.bf16.msra.mxu0 0
    %412 = vmatprep.subr.bf16.mxu0 0
    %413 = vmatpush1.bf16.msra.mxu0 0
    %414 = vmatprep.subr.bf16.mxu0 0
    %415 = vmatpush1.bf16.msra.mxu0 0
    %416 = vmatprep.subr.bf16.mxu0 0
    %417 = vmatpush1.bf16.msra.mxu0 0
    %418 = vmatprep.subr.bf16.mxu0 0
    %419 = vmatpush1.bf16.msra.mxu0 0
    %420 = vmatprep.subr.bf16.mxu0 0
    %421 = vmatpush1.bf16.msra.mxu0 0
    %422 = vmatprep.subr.bf16.mxu0 0
    %423 = vmatpush1.bf16.msra.mxu0 0
    %424 = vmatprep.mubr.bf16.mxu0 0
    %425 = vmatmul.mubr.bf16.gmra.mrb[0].mxu0 %v390
    %v426 = vpop.f32.mrb[0].mxu0
    %v427 = vadd.f32 0.0, %v426
    %v428 = vpop.f32.mrb[0].mxu0
    %v429 = vpop.f32.mrb[0].mxu0
    %v430 = vpop.f32.mrb[0].mxu0
    %431 = vdwg.mxu0
    %v436 = vunpack.c.l.b16 %v365
    %v437 = vunpack.c.l.b16 %v366
    %v438 = vunpack.c.l.b16 %v367
    %v439 = vunpack.c.l.b16 %v368
    %v440 = vpack.c.b16 %v437, %v436
    %v441 = vpack.c.b16 %v439, %v438
    %v445 = vsel %vm96, %v358, 0
    %447 = vmatprep.subr.bf16.mxu0 0
    %448 = vmatpush1.bf16.msra.mxu0 %v440
    %449 = vmatprep.subr.bf16.mxu0 0
    %450 = vmatpush1.bf16.msra.mxu0 %v441
    %451 = vmatprep.subr.bf16.mxu0 0
    %452 = vmatpush1.bf16.msra.mxu0 0
    %453 = vmatprep.subr.bf16.mxu0 0
    %454 = vmatpush1.bf16.msra.mxu0 0
    %455 = vmatprep.subr.bf16.mxu0 0
    %456 = vmatpush1.bf16.msra.mxu0 0
    %457 = vmatprep.subr.bf16.mxu0 0
    %458 = vmatpush1.bf16.msra.mxu0 0
    %459 = vmatprep.subr.bf16.mxu0 0
    %460 = vmatpush1.bf16.msra.mxu0 0
    %461 = vmatprep.subr.bf16.mxu0 0
    %462 = vmatpush1.bf16.msra.mxu0 0
    %463 = vmatprep.subr.bf16.mxu0 0
    %464 = vmatpush1.bf16.msra.mxu0 0
    %465 = vmatprep.subr.bf16.mxu0 0
    %466 = vmatpush1.bf16.msra.mxu0 0
    %467 = vmatprep.subr.bf16.mxu0 0
    %468 = vmatpush1.bf16.msra.mxu0 0
    %469 = vmatprep.subr.bf16.mxu0 0
    %470 = vmatpush1.bf16.msra.mxu0 0
    %471 = vmatprep.subr.bf16.mxu0 0
    %472 = vmatpush1.bf16.msra.mxu0 0
    %473 = vmatprep.subr.bf16.mxu0 0
    %474 = vmatpush1.bf16.msra.mxu0 0
    %475 = vmatprep.subr.bf16.mxu0 0
    %476 = vmatpush1.bf16.msra.mxu0 0
    %477 = vmatprep.subr.bf16.mxu0 0
    %478 = vmatpush1.bf16.msra.mxu0 0
    %479 = vmatprep.mubr.bf16.mxu0 0
    %480 = vmatmul.mubr.bf16.gmra.mrb[0].mxu0 %v445
    %v481 = vpop.f32.mrb[0].mxu0
    %v482 = vadd.f32 0.0, %v481
    %v483 = vpop.f32.mrb[0].mxu0
    %v484 = vpop.f32.mrb[0].mxu0
    %v485 = vpop.f32.mrb[0].mxu0
    %486 = vdwg.mxu0
    %v491 = vunpack.c.l.b16 %v369
    %v492 = vunpack.c.l.b16 %v370
    %v493 = vunpack.c.l.b16 %v371
    %v494 = vunpack.c.l.b16 %v372
    %v495 = vpack.c.b16 %v492, %v491
    %v496 = vpack.c.b16 %v494, %v493
    %v500 = vsel %vm96, %v359, 0
    %502 = vmatprep.subr.bf16.mxu0 0
    %503 = vmatpush1.bf16.msra.mxu0 %v495
    %504 = vmatprep.subr.bf16.mxu0 0
    %505 = vmatpush1.bf16.msra.mxu0 %v496
    %506 = vmatprep.subr.bf16.mxu0 0
    %507 = vmatpush1.bf16.msra.mxu0 0
    %508 = vmatprep.subr.bf16.mxu0 0
    %509 = vmatpush1.bf16.msra.mxu0 0
    %510 = vmatprep.subr.bf16.mxu0 0
    %511 = vmatpush1.bf16.msra.mxu0 0
    %512 = vmatprep.subr.bf16.mxu0 0
    %513 = vmatpush1.bf16.msra.mxu0 0
    %514 = vmatprep.subr.bf16.mxu0 0
    %515 = vmatpush1.bf16.msra.mxu0 0
    %516 = vmatprep.subr.bf16.mxu0 0
    %517 = vmatpush1.bf16.msra.mxu0 0
    %518 = vmatprep.subr.bf16.mxu0 0
    %519 = vmatpush1.bf16.msra.mxu0 0
    %520 = vmatprep.subr.bf16.mxu0 0
    %521 = vmatpush1.bf16.msra.mxu0 0
    %522 = vmatprep.subr.bf16.mxu0 0
    %523 = vmatpush1.bf16.msra.mxu0 0
    %524 = vmatprep.subr.bf16.mxu0 0
    %525 = vmatpush1.bf16.msra.mxu0 0
    %526 = vmatprep.subr.bf16.mxu0 0
    %527 = vmatpush1.bf16.msra.mxu0 0
    %528 = vmatprep.subr.bf16.mxu0 0
    %529 = vmatpush1.bf16.msra.mxu0 0
    %530 = vmatprep.subr.bf16.mxu0 0
    %531 = vmatpush1.bf16.msra.mxu0 0
    %532 = vmatprep.subr.bf16.mxu0 0
    %533 = vmatpush1.bf16.msra.mxu0 0
    %534 = vmatprep.mubr.bf16.mxu0 0
    %535 = vmatmul.mubr.bf16.gmra.mrb[0].mxu0 %v500
    %v536 = vpop.f32.mrb[0].mxu0
    %v537 = vadd.f32 0.0, %v536
    %v538 = vpop.f32.mrb[0].mxu0
    %v539 = vpop.f32.mrb[0].mxu0
    %v540 = vpop.f32.mrb[0].mxu0
    %541 = vdwg.mxu0
    %v546 = vunpack.c.l.b16 %v373
    %v547 = vunpack.c.l.b16 %v374
    %v548 = vunpack.c.l.b16 %v375
    %v549 = vunpack.c.l.b16 %v376
    %v550 = vpack.c.b16 %v547, %v546
    %v551 = vpack.c.b16 %v549, %v548
    %v555 = vsel %vm96, %v360, 0
    %557 = vmatprep.subr.bf16.mxu0 0
    %558 = vmatpush1.bf16.msra.mxu0 %v550
    %559 = vmatprep.subr.bf16.mxu0 0
    %560 = vmatpush1.bf16.msra.mxu0 %v551
    %561 = vmatprep.subr.bf16.mxu0 0
    %562 = vmatpush1.bf16.msra.mxu0 0
    %563 = vmatprep.subr.bf16.mxu0 0
    %564 = vmatpush1.bf16.msra.mxu0 0
    %565 = vmatprep.subr.bf16.mxu0 0
    %566 = vmatpush1.bf16.msra.mxu0 0
    %567 = vmatprep.subr.bf16.mxu0 0
    %568 = vmatpush1.bf16.msra.mxu0 0
    %569 = vmatprep.subr.bf16.mxu0 0
    %570 = vmatpush1.bf16.msra.mxu0 0
    %571 = vmatprep.subr.bf16.mxu0 0
    %572 = vmatpush1.bf16.msra.mxu0 0
    %573 = vmatprep.subr.bf16.mxu0 0
    %574 = vmatpush1.bf16.msra.mxu0 0
    %575 = vmatprep.subr.bf16.mxu0 0
    %576 = vmatpush1.bf16.msra.mxu0 0
    %577 = vmatprep.subr.bf16.mxu0 0
    %578 = vmatpush1.bf16.msra.mxu0 0
    %579 = vmatprep.subr.bf16.mxu0 0
    %580 = vmatpush1.bf16.msra.mxu0 0
    %581 = vmatprep.subr.bf16.mxu0 0
    %582 = vmatpush1.bf16.msra.mxu0 0
    %583 = vmatprep.subr.bf16.mxu0 0
    %584 = vmatpush1.bf16.msra.mxu0 0
    %585 = vmatprep.subr.bf16.mxu0 0
    %586 = vmatpush1.bf16.msra.mxu0 0
    %587 = vmatprep.subr.bf16.mxu0 0
    %588 = vmatpush1.bf16.msra.mxu0 0
    %589 = vmatprep.mubr.bf16.mxu0 0
    %590 = vmatmul.mubr.bf16.gmra.mrb[0].mxu0 %v555
    %v591 = vpop.f32.mrb[0].mxu0
    %v592 = vadd.f32 0.0, %v591
    %v593 = vpop.f32.mrb[0].mxu0
    %v594 = vpop.f32.mrb[0].mxu0
    %v595 = vpop.f32.mrb[0].mxu0
    %596 = vdwg.mxu0
    %v597 = vlaneseq
    %v598 = vand.u32 %v597, 127
    %vm599 = vcmp.lt.s32.totalorder %v598, 64
    %v600 = vsel %vm599, %v427, -1e+30
    %v601 = vsel %vm599, %v482, -1e+30
    %v602 = vsel %vm599, %v537, -1e+30
    %v603 = vsel %vm599, %v592, -1e+30
    %v604 = vsel %vm198, %v600, -inf
    %605 = vmax.xlane.f32.xlu0 %v604
    %v606 = vpop.xlane.xlu0 %605
    %v607 = vsel %vm198, %v601, -inf
    %608 = vmax.xlane.f32.xlu0 %v607
    %v609 = vpop.xlane.xlu0 %608
    %v610 = vsel %vm198, %v602, -inf
    %611 = vmax.xlane.f32.xlu0 %v610
    %v612 = vpop.xlane.xlu0 %611
    %v613 = vsel %vm198, %v603, -inf
    %614 = vmax.xlane.f32.xlu0 %v613
    %v615 = vpop.xlane.xlu0 %614
    %v616 = vsub.f32 %v600, %v606
    %v617 = vsub.f32 %v601, %v609
    %v618 = vsub.f32 %v602, %v612
    %v619 = vsub.f32 %v603, %v615
    %v620 = vmul.f32 %v616, 1.442695
    %v621 = vpow.pop %v620
    %v622 = vmul.f32 %v617, 1.442695
    %v623 = vpow.pop %v622
    %v624 = vmul.f32 %v618, 1.442695
    %v625 = vpow.pop %v624
    %v626 = vmul.f32 %v619, 1.442695
    %v627 = vpow.pop %v626
    %v628 = vsel %vm198, %v621, 0.0
    %629 = vadd.xlane.f32.xlu0 %v628
    %v630 = vpop.xlane.xlu0 %629
    %v631 = vsel %vm198, %v623, 0.0
    %632 = vadd.xlane.f32.xlu0 %v631
    %v633 = vpop.xlane.xlu0 %632
    %v634 = vsel %vm198, %v625, 0.0
    %635 = vadd.xlane.f32.xlu0 %v634
    %v636 = vpop.xlane.xlu0 %635
    %v637 = vsel %vm198, %v627, 0.0
    %638 = vadd.xlane.f32.xlu0 %v637
    %v639 = vpop.xlane.xlu0 %638
    %v640 = vrcp.pop %v630
    %v641 = vmul.f32 %v621, %v640
    %v642 = vrcp.pop %v633
    %v643 = vmul.f32 %v623, %v642
    %v644 = vrcp.pop %v636
    %v645 = vmul.f32 %v625, %v644
    %v646 = vrcp.pop %v639
    %v647 = vmul.f32 %v627, %v646
    %648 = vst [vmem:[#allocation9] sm:$0x3] %v641
    %649 = vst [vmem:[#allocation9 + $0x2] sm:$0x3] %v643
    %650 = vst [vmem:[#allocation9 + $0x4] sm:$0x3] %v645
    %651 = vst [vmem:[#allocation9 + $0x6] sm:$0x3] %v647
    // Predicated region
    $region30: #{tpu_custom_call.1} parent=1 // pred_check
      _
    $region31: #{tpu_custom_call.1} parent=1 // pred_check_branch
      %653 = sbr.rel (0) target = $region33
    $region32: #{tpu_custom_call.1} parent=1 // pred_region
      %s655 = ssub.s32 128, 128
      %656 = vsyncadd [#allocation5], %s655
      %s657 = sshll.u32 [#allocation9], 4
      %s658 = int_to_ptr.vmem [resolvable:$true] %s657
      %663 = dma.vmem_to_hbm [thread:$0]  %s658, 128, %s4, [#allocation5], 32, 32, 2
    $region33: #{tpu_custom_call.1} parent=1 // pred_fallthru
      _
    // Predicated region
    $region34: #{tpu_custom_call.1} parent=1 // pred_check
      _
    $region35: #{tpu_custom_call.1} parent=1 // pred_check_branch
      %665 = sbr.rel (0) target = $region37
    $region36: #{tpu_custom_call.1} parent=1 // pred_region
      %666 = dma.done [#allocation5], 128
    $region37: #{tpu_custom_call.1} parent=1 // pred_fallthru
      _
    %667 = vsyncpa [#allocation4], 1
    %668 = vsyncpa [#allocation7], 1
    %669 = vsyncpa [#allocation5], 1

</llo_original>
